<compile_context>
chip_gen: v5e
topology: v5e:2x2
jax: 0.10.0
libtpu: 0.0.40
codegen_flags: <defaults>
</compile_context>

<pallas_src>
import numpy as np
import jax
import jax.numpy as jnp
from jax.experimental import pallas as pl
from jax.experimental.pallas import tpu as pltpu

IMAGENET_MEAN = (0.485, 0.456, 0.406)
IMAGENET_STD = (0.229, 0.224, 0.225)
# ToTensor (/255) folded into the normalize scale: out = resized * SCALE_c + BIAS_c
_SCALE = tuple(1.0 / (255.0 * s) for s in IMAGENET_STD)
_BIAS = tuple(-m / s for m, s in zip(IMAGENET_MEAN, IMAGENET_STD))


# ----------------------------- numpy glue (trace-time) -----------------------------

def _resize_matrix(in_size: int, out_size: int) -> np.ndarray:
    """PIL-style antialiased bilinear resize as a dense (out, in) matrix."""
    scale = in_size / out_size
    filterscale = max(scale, 1.0)                      # widen support when downsampling
    centers = (np.arange(out_size) + 0.5) * scale      # half-pixel centers
    src = np.arange(in_size) + 0.5
    x = (src[None, :] - centers[:, None]) / filterscale
    w = np.maximum(0.0, 1.0 - np.abs(x))               # triangle filter
    w = w / np.sum(w, axis=1, keepdims=True)
    return w.astype(np.float32)


def _resize_crop_matrix(in_size: int, resized: int, crop: int) -> np.ndarray:
    """Resize in_size->resized then center-crop to `crop`, as one (crop, in_size) matrix."""
    m = _resize_matrix(in_size, resized)
    top = int(round((resized - crop) / 2.0))
    return m[top:top + crop]


def _resized_hw(h: int, w: int, target: int) -> tuple[int, int]:
    """torchvision Resize(int): shorter side -> target, aspect ratio preserved."""
    if h <= w:
        return target, max(target, int(round(target * w / h)))
    return max(target, int(round(target * h / w))), target


def _vmem_bytes(B: int, H: int, W: int, T: int, Tp: int) -> int:
    return (2 * B * 3 * H * W                 # double-buffered uint8 input block
            + 2 * B * 3 * T * Tp * 4          # double-buffered f32 output block
            + 2 * (3 * T * H + W * Tp) * 2    # bf16 weight matrices (double-buffered)
            + 2 * B * 3 * H * Tp * 2)         # bf16 intermediate (+ f32 accum headroom)


def _pick_batch_block(N: int, H: int, W: int, T: int, Tp: int, budget: int = 40 << 20) -> int:
    for b in (8, 4, 2, 1):
        if N % b == 0 and _vmem_bytes(b, H, W, T, Tp) <= budget:
            return b
    # TODO(synk): W-axis chunking of the first matmul (extra 'arbitrary' grid axis) for
    #             very large images that do not fit even at B=1 on v7x's 64 MiB VMEM.
    return 1


# ----------------------------------- kernel -----------------------------------

def _preproc_kernel(img_ref, wwt_ref, whs_ref, out_ref):
    # img_ref: (B, 3*H, W)   uint8
    # wwt_ref: (W, Tp)       bf16  column resize+crop matrix (transposed, zero-padded lanes)
    # whs_ref: (3, T, H)     bf16  row resize+crop matrix, pre-scaled by 1/(255*std_c)
    # out_ref: (B, 3, T, Tp) f32
    B = img_ref.shape[0]
    W = img_ref.shape[2]
    Tp = wwt_ref.shape[1]
    _, T, H = whs_ref.shape

    # u8 -> bf16 cast in-kernel (DMA stays 1 byte/pixel); collapse leading dims (free).
    x = img_ref[...].astype(jnp.bfloat16).reshape(B * 3 * H, W)

    # 1) Column resize for the whole block in ONE fused MXU matmul (lane-dense, Tp % 128 == 0).
    tmp = jnp.dot(x, wwt_ref[...], preferred_element_type=jnp.float32)
    tmp = tmp.astype(jnp.bfloat16).reshape(B * 3, H, Tp)

    # 2) Row resize per (image, channel). The ToTensor/Normalize scale is folded into the
    #    weights, so the epilogue is a single broadcast bias add + one lane-dense store per slab.
    for b in range(B):
        for c in range(3):
            res = jnp.dot(whs_ref[c], tmp[b * 3 + c],
                          preferred_element_type=jnp.float32)       # (T, Tp) f32
            out_ref[b, c] = res + _BIAS[c]


# ----------------------------------- wrapper -----------------------------------

def imagenet_preprocess(x_u8: jax.Array, target: int = 299) -> jax.Array:
    """x_u8: (N, 3, H, W) uint8 -> (N, 3, target, target) float32."""
    N, C, H, W = x_u8.shape
    assert C == 3
    assert x_u8.dtype == jnp.uint8

    # torchvision Resize(target) (shorter side -> target, antialiased bilinear) followed by
    # CenterCrop(target), both folded into per-axis dense matrices.
    Hr, Wr = _resized_hw(H, W, target)
    T = target
    Tp = ((T + 127) // 128) * 128                       # lane-padded output width

    wh = _resize_crop_matrix(H, Hr, T)                  # (T, H)
    ww = _resize_crop_matrix(W, Wr, T)                  # (T, W)

    whs_np = np.stack([wh * s for s in _SCALE]).astype(np.float32)   # (3, T, H) scale folded in
    wwt_np = np.zeros((W, Tp), np.float32)
    wwt_np[:, :T] = ww.T                                              # (W, Tp) zero-padded lanes

    whs = jnp.asarray(whs_np, dtype=jnp.bfloat16)
    wwt = jnp.asarray(wwt_np, dtype=jnp.bfloat16)

    B = _pick_batch_block(N, H, W, T, Tp)
    vmem_limit = int(min(56 << 20, max(16 << 20, 1.25 * _vmem_bytes(B, H, W, T, Tp))))

    x3 = x_u8.reshape(N, 3 * H, W)                      # free metadata reshape in HBM

    out = pl.pallas_call(
        _preproc_kernel,
        out_shape=jax.ShapeDtypeStruct((N, 3, T, Tp), jnp.float32),
        grid=(N // B,),
        in_specs=[
            pl.BlockSpec((B, 3 * H, W), lambda n: (n, 0, 0)),     # B uint8 images per step
            pl.BlockSpec((W, Tp), lambda n: (0, 0)),              # column resize matrix (bf16)
            pl.BlockSpec((3, T, H), lambda n: (0, 0, 0)),         # scaled row resize matrices
        ],
        out_specs=pl.BlockSpec((B, 3, T, Tp), lambda n: (n, 0, 0, 0)),
        compiler_params=pltpu.CompilerParams(
            # TODO(synk): try pltpu.CORE_PARALLEL on v7x so the batch axis splits across
            #             both TensorCores; plain "parallel" is safe on all generations.
            dimension_semantics=("parallel",),
            vmem_limit_bytes=vmem_limit,
        ),
    )(x3, wwt, whs)

    return out[..., :T] if Tp != T else out


# ----------------------------------- self-test -----------------------------------

def _reference(x_u8, target):
    """Pure-JAX f32 reference of the same math (resize+crop matrices, /255, normalize)."""
    N, C, H, W = x_u8.shape
    Hr, Wr = _resized_hw(H, W, target)
    wh = jnp.asarray(_resize_crop_matrix(H, Hr, target))
    ww = jnp.asarray(_resize_crop_matrix(W, Wr, target))
    x = x_u8.astype(jnp.float32)
    res = jnp.einsum("th,nchw,sw->ncts", wh, x, ww)
    mean = jnp.asarray(IMAGENET_MEAN, dtype=jnp.float32).reshape(1, 3, 1, 1)
    std = jnp.asarray(IMAGENET_STD, dtype=jnp.float32).reshape(1, 3, 1, 1)
    return (res / 255.0 - mean) / std


if __name__ == "__main__":
    key = jax.random.PRNGKey(0)
    N, C, H, W = 2, 3, 16, 16
    target = 8
    x = jax.random.randint(key, (N, C, H, W), 0, 256, dtype=jnp.int32).astype(jnp.uint8)

    out = jax.block_until_ready(imagenet_preprocess(x, target=target))
    ref = jax.block_until_ready(_reference(x, target))

    assert out.shape == (N, C, target, target) and out.dtype == jnp.float32
    # bf16 MXU path perturbs results slightly vs the f32 reference -> relaxed tolerance.
    np.testing.assert_allclose(np.asarray(out), np.asarray(ref), rtol=5e-2, atol=5e-2)

    print("KERNEL_OK")
</pallas_src>

<mosaic_0001>
module attributes {stable_mosaic.version = 11 : i64} {
  func.func @_preproc_kernel(%arg0: i32, %arg1: memref<2x48x16xi8, #tpu.memory_space<vmem>>, %arg2: memref<16x128xbf16, #tpu.memory_space<vmem>>, %arg3: memref<3x8x16xbf16, #tpu.memory_space<vmem>>, %arg4: memref<2x3x8x128xf32, #tpu.memory_space<vmem>>) attributes {dimension_semantics = [#tpu.dimension_semantics<parallel>], iteration_bounds = array<i64: 1>, scalar_prefetch = 0 : i64, scratch_operands = 0 : i64, tpu.core_type = #tpu.core_type<tc>, window_params = [{transform_indices = @transform_0, window_bounds = array<i64: 2, 48, 16>}, {pipeline_mode = #tpu.pipeline_mode<synchronous>, transform_indices = @transform_1, window_bounds = array<i64: 16, 128>}, {pipeline_mode = #tpu.pipeline_mode<synchronous>, transform_indices = @transform_2, window_bounds = array<i64: 3, 8, 16>}, {transform_indices = @transform_3, window_bounds = array<i64: 2, 3, 8, 128>}]} {
    %c0 = arith.constant 0 : index
    %c0_0 = arith.constant 0 : index
    %c0_1 = arith.constant 0 : index
    %0 = vector.load %arg1[%c0, %c0_0, %c0_1] : memref<2x48x16xi8, #tpu.memory_space<vmem>>, vector<2x48x16xi8>
    %1 = arith.uitofp %0 : vector<2x48x16xi8> to vector<2x48x16xbf16>
    %2 = vector.shape_cast %1 : vector<2x48x16xbf16> to vector<96x16xbf16>
    %c0_2 = arith.constant 0 : index
    %c0_3 = arith.constant 0 : index
    %3 = vector.load %arg2[%c0_2, %c0_3] : memref<16x128xbf16, #tpu.memory_space<vmem>>, vector<16x128xbf16>
    %cst = arith.constant dense<0.000000e+00> : vector<96x128xf32>
    %4 = tpu.matmul %2, %3, %cst {dimension_numbers = #tpu.dot_dimension_numbers<[1], [0], [0], [1], [0, 0, 1, 1], [], []>} : vector<96x16xbf16>, vector<16x128xbf16>, vector<96x128xf32> -> vector<96x128xf32>
    %5 = arith.truncf %4 : vector<96x128xf32> to vector<96x128xbf16>
    %6 = vector.shape_cast %5 : vector<96x128xbf16> to vector<6x16x128xbf16>
    %c0_4 = arith.constant 0 : index
    %c0_5 = arith.constant 0 : index
    %c0_6 = arith.constant 0 : index
    %7 = vector.load %arg3[%c0_4, %c0_5, %c0_6] : memref<3x8x16xbf16, #tpu.memory_space<vmem>>, vector<1x8x16xbf16>
    %8 = vector.shape_cast %7 : vector<1x8x16xbf16> to vector<8x16xbf16>
    %9 = vector.extract_strided_slice %6 {offsets = [0, 0, 0], sizes = [1, 16, 128], strides = [1, 1, 1]} : vector<6x16x128xbf16> to vector<1x16x128xbf16>
    %10 = vector.shape_cast %9 : vector<1x16x128xbf16> to vector<16x128xbf16>
    %cst_7 = arith.constant dense<0.000000e+00> : vector<8x128xf32>
    %11 = tpu.matmul %8, %10, %cst_7 {dimension_numbers = #tpu.dot_dimension_numbers<[1], [0], [0], [1], [0, 0, 1, 1], [], []>} : vector<8x16xbf16>, vector<16x128xbf16>, vector<8x128xf32> -> vector<8x128xf32>
    %cst_8 = arith.constant -2.11790395 : f32
    %12 = vector.broadcast %cst_8 : f32 to vector<8x128xf32>
    %13 = arith.addf %11, %12 : vector<8x128xf32>
    %c0_9 = arith.constant 0 : index
    %c0_10 = arith.constant 0 : index
    %c0_11 = arith.constant 0 : index
    %c0_12 = arith.constant 0 : index
    %14 = vector.load %arg4[%c0_9, %c0_10, %c0_11, %c0_12] : memref<2x3x8x128xf32, #tpu.memory_space<vmem>>, vector<1x1x8x128xf32>
    %15 = vector.shape_cast %14 : vector<1x1x8x128xf32> to vector<8x128xf32>
    %16 = vector.shape_cast %13 : vector<8x128xf32> to vector<1x1x8x128xf32>
    tpu.vector_store %arg4[%c0_9, %c0_10, %c0_11, %c0_12], %16 {strides = array<i32>} : memref<2x3x8x128xf32, #tpu.memory_space<vmem>>, vector<1x1x8x128xf32>,
    %c1 = arith.constant 1 : index
    %c0_13 = arith.constant 0 : index
    %c0_14 = arith.constant 0 : index
    %17 = vector.load %arg3[%c1, %c0_13, %c0_14] : memref<3x8x16xbf16, #tpu.memory_space<vmem>>, vector<1x8x16xbf16>
    %18 = vector.shape_cast %17 : vector<1x8x16xbf16> to vector<8x16xbf16>
    %19 = vector.extract_strided_slice %6 {offsets = [1, 0, 0], sizes = [1, 16, 128], strides = [1, 1, 1]} : vector<6x16x128xbf16> to vector<1x16x128xbf16>
    %20 = vector.shape_cast %19 : vector<1x16x128xbf16> to vector<16x128xbf16>
    %cst_15 = arith.constant dense<0.000000e+00> : vector<8x128xf32>
    %21 = tpu.matmul %18, %20, %cst_15 {dimension_numbers = #tpu.dot_dimension_numbers<[1], [0], [0], [1], [0, 0, 1, 1], [], []>} : vector<8x16xbf16>, vector<16x128xbf16>, vector<8x128xf32> -> vector<8x128xf32>
    %cst_16 = arith.constant -2.03571439 : f32
    %22 = vector.broadcast %cst_16 : f32 to vector<8x128xf32>
    %23 = arith.addf %21, %22 : vector<8x128xf32>
    %c0_17 = arith.constant 0 : index
    %c1_18 = arith.constant 1 : index
    %c0_19 = arith.constant 0 : index
    %c0_20 = arith.constant 0 : index
    %24 = vector.load %arg4[%c0_17, %c1_18, %c0_19, %c0_20] : memref<2x3x8x128xf32, #tpu.memory_space<vmem>>, vector<1x1x8x128xf32>
    %25 = vector.shape_cast %24 : vector<1x1x8x128xf32> to vector<8x128xf32>
    %26 = vector.shape_cast %23 : vector<8x128xf32> to vector<1x1x8x128xf32>
    tpu.vector_store %arg4[%c0_17, %c1_18, %c0_19, %c0_20], %26 {strides = array<i32>} : memref<2x3x8x128xf32, #tpu.memory_space<vmem>>, vector<1x1x8x128xf32>,
    %c2 = arith.constant 2 : index
    %c0_21 = arith.constant 0 : index
    %c0_22 = arith.constant 0 : index
    %27 = vector.load %arg3[%c2, %c0_21, %c0_22] : memref<3x8x16xbf16, #tpu.memory_space<vmem>>, vector<1x8x16xbf16>
    %28 = vector.shape_cast %27 : vector<1x8x16xbf16> to vector<8x16xbf16>
    %29 = vector.extract_strided_slice %6 {offsets = [2, 0, 0], sizes = [1, 16, 128], strides = [1, 1, 1]} : vector<6x16x128xbf16> to vector<1x16x128xbf16>
    %30 = vector.shape_cast %29 : vector<1x16x128xbf16> to vector<16x128xbf16>
    %cst_23 = arith.constant dense<0.000000e+00> : vector<8x128xf32>
    %31 = tpu.matmul %28, %30, %cst_23 {dimension_numbers = #tpu.dot_dimension_numbers<[1], [0], [0], [1], [0, 0, 1, 1], [], []>} : vector<8x16xbf16>, vector<16x128xbf16>, vector<8x128xf32> -> vector<8x128xf32>
    %cst_24 = arith.constant -1.80444443 : f32
    %32 = vector.broadcast %cst_24 : f32 to vector<8x128xf32>
    %33 = arith.addf %31, %32 : vector<8x128xf32>
    %c0_25 = arith.constant 0 : index
    %c2_26 = arith.constant 2 : index
    %c0_27 = arith.constant 0 : index
    %c0_28 = arith.constant 0 : index
    %34 = vector.load %arg4[%c0_25, %c2_26, %c0_27, %c0_28] : memref<2x3x8x128xf32, #tpu.memory_space<vmem>>, vector<1x1x8x128xf32>
    %35 = vector.shape_cast %34 : vector<1x1x8x128xf32> to vector<8x128xf32>
    %36 = vector.shape_cast %33 : vector<8x128xf32> to vector<1x1x8x128xf32>
    tpu.vector_store %arg4[%c0_25, %c2_26, %c0_27, %c0_28], %36 {strides = array<i32>} : memref<2x3x8x128xf32, #tpu.memory_space<vmem>>, vector<1x1x8x128xf32>,
    %c0_29 = arith.constant 0 : index
    %c0_30 = arith.constant 0 : index
    %c0_31 = arith.constant 0 : index
    %37 = vector.load %arg3[%c0_29, %c0_30, %c0_31] : memref<3x8x16xbf16, #tpu.memory_space<vmem>>, vector<1x8x16xbf16>
    %38 = vector.shape_cast %37 : vector<1x8x16xbf16> to vector<8x16xbf16>
    %39 = vector.extract_strided_slice %6 {offsets = [3, 0, 0], sizes = [1, 16, 128], strides = [1, 1, 1]} : vector<6x16x128xbf16> to vector<1x16x128xbf16>
    %40 = vector.shape_cast %39 : vector<1x16x128xbf16> to vector<16x128xbf16>
    %cst_32 = arith.constant dense<0.000000e+00> : vector<8x128xf32>
    %41 = tpu.matmul %38, %40, %cst_32 {dimension_numbers = #tpu.dot_dimension_numbers<[1], [0], [0], [1], [0, 0, 1, 1], [], []>} : vector<8x16xbf16>, vector<16x128xbf16>, vector<8x128xf32> -> vector<8x128xf32>
    %cst_33 = arith.constant -2.11790395 : f32
    %42 = vector.broadcast %cst_33 : f32 to vector<8x128xf32>
    %43 = arith.addf %41, %42 : vector<8x128xf32>
    %c1_34 = arith.constant 1 : index
    %c0_35 = arith.constant 0 : index
    %c0_36 = arith.constant 0 : index
    %c0_37 = arith.constant 0 : index
    %44 = vector.load %arg4[%c1_34, %c0_35, %c0_36, %c0_37] : memref<2x3x8x128xf32, #tpu.memory_space<vmem>>, vector<1x1x8x128xf32>
    %45 = vector.shape_cast %44 : vector<1x1x8x128xf32> to vector<8x128xf32>
    %46 = vector.shape_cast %43 : vector<8x128xf32> to vector<1x1x8x128xf32>
    tpu.vector_store %arg4[%c1_34, %c0_35, %c0_36, %c0_37], %46 {strides = array<i32>} : memref<2x3x8x128xf32, #tpu.memory_space<vmem>>, vector<1x1x8x128xf32>,
    %c1_38 = arith.constant 1 : index
    %c0_39 = arith.constant 0 : index
    %c0_40 = arith.constant 0 : index
    %47 = vector.load %arg3[%c1_38, %c0_39, %c0_40] : memref<3x8x16xbf16, #tpu.memory_space<vmem>>, vector<1x8x16xbf16>
    %48 = vector.shape_cast %47 : vector<1x8x16xbf16> to vector<8x16xbf16>
    %49 = vector.extract_strided_slice %6 {offsets = [4, 0, 0], sizes = [1, 16, 128], strides = [1, 1, 1]} : vector<6x16x128xbf16> to vector<1x16x128xbf16>
    %50 = vector.shape_cast %49 : vector<1x16x128xbf16> to vector<16x128xbf16>
    %cst_41 = arith.constant dense<0.000000e+00> : vector<8x128xf32>
    %51 = tpu.matmul %48, %50, %cst_41 {dimension_numbers = #tpu.dot_dimension_numbers<[1], [0], [0], [1], [0, 0, 1, 1], [], []>} : vector<8x16xbf16>, vector<16x128xbf16>, vector<8x128xf32> -> vector<8x128xf32>
    %cst_42 = arith.constant -2.03571439 : f32
    %52 = vector.broadcast %cst_42 : f32 to vector<8x128xf32>
    %53 = arith.addf %51, %52 : vector<8x128xf32>
    %c1_43 = arith.constant 1 : index
    %c1_44 = arith.constant 1 : index
    %c0_45 = arith.constant 0 : index
    %c0_46 = arith.constant 0 : index
    %54 = vector.load %arg4[%c1_43, %c1_44, %c0_45, %c0_46] : memref<2x3x8x128xf32, #tpu.memory_space<vmem>>, vector<1x1x8x128xf32>
    %55 = vector.shape_cast %54 : vector<1x1x8x128xf32> to vector<8x128xf32>
    %56 = vector.shape_cast %53 : vector<8x128xf32> to vector<1x1x8x128xf32>
    tpu.vector_store %arg4[%c1_43, %c1_44, %c0_45, %c0_46], %56 {strides = array<i32>} : memref<2x3x8x128xf32, #tpu.memory_space<vmem>>, vector<1x1x8x128xf32>,
    %c2_47 = arith.constant 2 : index
    %c0_48 = arith.constant 0 : index
    %c0_49 = arith.constant 0 : index
    %57 = vector.load %arg3[%c2_47, %c0_48, %c0_49] : memref<3x8x16xbf16, #tpu.memory_space<vmem>>, vector<1x8x16xbf16>
    %58 = vector.shape_cast %57 : vector<1x8x16xbf16> to vector<8x16xbf16>
    %59 = vector.extract_strided_slice %6 {offsets = [5, 0, 0], sizes = [1, 16, 128], strides = [1, 1, 1]} : vector<6x16x128xbf16> to vector<1x16x128xbf16>
    %60 = vector.shape_cast %59 : vector<1x16x128xbf16> to vector<16x128xbf16>
    %cst_50 = arith.constant dense<0.000000e+00> : vector<8x128xf32>
    %61 = tpu.matmul %58, %60, %cst_50 {dimension_numbers = #tpu.dot_dimension_numbers<[1], [0], [0], [1], [0, 0, 1, 1], [], []>} : vector<8x16xbf16>, vector<16x128xbf16>, vector<8x128xf32> -> vector<8x128xf32>
    %cst_51 = arith.constant -1.80444443 : f32
    %62 = vector.broadcast %cst_51 : f32 to vector<8x128xf32>
    %63 = arith.addf %61, %62 : vector<8x128xf32>
    %c1_52 = arith.constant 1 : index
    %c2_53 = arith.constant 2 : index
    %c0_54 = arith.constant 0 : index
    %c0_55 = arith.constant 0 : index
    %64 = vector.load %arg4[%c1_52, %c2_53, %c0_54, %c0_55] : memref<2x3x8x128xf32, #tpu.memory_space<vmem>>, vector<1x1x8x128xf32>
    %65 = vector.shape_cast %64 : vector<1x1x8x128xf32> to vector<8x128xf32>
    %66 = vector.shape_cast %63 : vector<8x128xf32> to vector<1x1x8x128xf32>
    tpu.vector_store %arg4[%c1_52, %c2_53, %c0_54, %c0_55], %66 {strides = array<i32>} : memref<2x3x8x128xf32, #tpu.memory_space<vmem>>, vector<1x1x8x128xf32>,
    return
  }
  func.func @transform_0(%arg0: i32) -> (i32, i32, i32) {
    %c0_i32 = arith.constant 0 : i32
    %c0_i32_0 = arith.constant 0 : i32
    %c0_i32_1 = arith.constant 0 : i32
    return %arg0, %c0_i32, %c0_i32_0 : i32, i32, i32
  }
  func.func @transform_1(%arg0: i32) -> (i32, i32) {
    %c0_i32 = arith.constant 0 : i32
    %c0_i32_0 = arith.constant 0 : i32
    %c0_i32_1 = arith.constant 0 : i32
    return %c0_i32, %c0_i32_0 : i32, i32
  }
  func.func @transform_2(%arg0: i32) -> (i32, i32, i32) {
    %c0_i32 = arith.constant 0 : i32
    %c0_i32_0 = arith.constant 0 : i32
    %c0_i32_1 = arith.constant 0 : i32
    %c0_i32_2 = arith.constant 0 : i32
    return %c0_i32, %c0_i32_0, %c0_i32_1 : i32, i32, i32
  }
  func.func @transform_3(%arg0: i32) -> (i32, i32, i32, i32) {
    %c0_i32 = arith.constant 0 : i32
    %c0_i32_0 = arith.constant 0 : i32
    %c0_i32_1 = arith.constant 0 : i32
    %c0_i32_2 = arith.constant 0 : i32
    return %arg0, %c0_i32, %c0_i32_0, %c0_i32_1 : i32, i32, i32, i32
  }
}

</mosaic_0001>

<llo_original>
// kernel: tpu_custom_call.1
$region0: #{tpu_custom_call.1}
  #allocation0 [shape = 'u32[]', space=smem, size = 0x4, offset = 0x4, fixed_abs, tag = 'smem constant byte address 0x4 - core index']
  #allocation1 [shape = 'u32[72,128]{1,0:T(1,128)}', space=vmem, size = 0x9000, scoped, tag = 'internal scratch']
  %s0 = inlined_call_operand.vmem [shape: u8[2,48,16], index: 0, kind: input, shape index: {}]
  %s1 = inlined_call_operand.vmem [shape: bf16[16,128], index: 1, kind: input, shape index: {}]
  %s2 = inlined_call_operand.vmem [shape: bf16[3,8,16], index: 2, kind: input, shape index: {}]
  %s3 = inlined_call_operand.hbm [shape: f32[2,3,8,128], index: 3, kind: output, shape index: {}]
  %s4 = sld [smem:[#allocation0]]
  $region22: #{tpu_custom_call.1} parent=0
    _
  %s6 = ssub.s32 1, %s4
  %s7 = scalar_select 0, %s6, %s4
  $region1: #{tpu_custom_call.1} parent=0
    #allocation2 [shape = 'u8[24576]{0}', space=vmem, size = 0x6000, scoped, tag = 'output window, operand 0, single buffered']
    #allocation3 [shape = 's32[1]{0}', space=sflag, size = 0x4, scoped, tag = 'scoped memory for tpu_custom_call.1']
    %8 = vsyncpa [#allocation3], 0
    // Predicated region
    $region2: #{tpu_custom_call.1} parent=1 // pred_check
      _
    $region3: #{tpu_custom_call.1} parent=1 // pred_check_branch
      %10 = sbr.rel (0) target = $region5
    $region4: #{tpu_custom_call.1} parent=1 // pred_region
      _
    $region5: #{tpu_custom_call.1} parent=1 // pred_fallthru
      _
    // Predicated region
    $region6: #{tpu_custom_call.1} parent=1 // pred_check
      _
    $region7: #{tpu_custom_call.1} parent=1 // pred_check_branch
      %12 = sbr.rel (0) target = $region9
    $region8: #{tpu_custom_call.1} parent=1 // pred_region
      _
    $region9: #{tpu_custom_call.1} parent=1 // pred_fallthru
      _
    // Predicated region
    $region10: #{tpu_custom_call.1} parent=1 // pred_check
      _
    $region11: #{tpu_custom_call.1} parent=1 // pred_check_branch
      %14 = sbr.rel (0) target = $region13
    $region12: #{tpu_custom_call.1} parent=1 // pred_region
      _
    $region13: #{tpu_custom_call.1} parent=1 // pred_fallthru
      _
    %v16 = vld [vmem:[%s0] sm:$0x3]
    %v17 = vld [vmem:[%s0 + $0x2] sm:$0x3]
    %v18 = vld [vmem:[%s0 + $0x4] sm:$0x3]
    %v19 = vld [vmem:[%s0 + $0x6] sm:$0x3]
    %v20 = vld [vmem:[%s0 + $0x8] sm:$0x3]
    %v21 = vld [vmem:[%s0 + $0xa] sm:$0x3]
    %v22 = vld [vmem:[%s0 + $0xc] sm:$0x3]
    %v23 = vld [vmem:[%s0 + $0xe] sm:$0x3]
    %v24 = vld [vmem:[%s0 + $0x10] sm:$0x3]
    %v25 = vld [vmem:[%s0 + $0x12] sm:$0x3]
    %v26 = vld [vmem:[%s0 + $0x14] sm:$0x3]
    %v27 = vld [vmem:[%s0 + $0x16] sm:$0x3]
    %v28 = vunpack.c.0.s8 %v16
    %v29 = vunpack.c.0.s8 %v17
    %v30 = vunpack.c.0.s8 %v18
    %v31 = vunpack.c.0.s8 %v19
    %v32 = vunpack.c.0.s8 %v20
    %v33 = vunpack.c.0.s8 %v21
    %v34 = vunpack.c.0.s8 %v22
    %v35 = vunpack.c.0.s8 %v23
    %v36 = vunpack.c.0.s8 %v24
    %v37 = vunpack.c.0.s8 %v25
    %v38 = vunpack.c.0.s8 %v26
    %v39 = vunpack.c.0.s8 %v27
    %v40 = vand.u32 %v28, 255
    %v41 = vand.u32 %v29, 255
    %v42 = vand.u32 %v30, 255
    %v43 = vand.u32 %v31, 255
    %v44 = vand.u32 %v32, 255
    %v45 = vand.u32 %v33, 255
    %v46 = vand.u32 %v34, 255
    %v47 = vand.u32 %v35, 255
    %v48 = vand.u32 %v36, 255
    %v49 = vand.u32 %v37, 255
    %v50 = vand.u32 %v38, 255
    %v51 = vand.u32 %v39, 255
    %v52 = vcvt.s32.f32 %v40
    %v53 = vcvt.s32.f32 %v41
    %v54 = vcvt.s32.f32 %v42
    %v55 = vcvt.s32.f32 %v43
    %v56 = vcvt.s32.f32 %v44
    %v57 = vcvt.s32.f32 %v45
    %v58 = vcvt.s32.f32 %v46
    %v59 = vcvt.s32.f32 %v47
    %v60 = vcvt.s32.f32 %v48
    %v61 = vcvt.s32.f32 %v49
    %v62 = vcvt.s32.f32 %v50
    %v63 = vcvt.s32.f32 %v51
    %v64 = vpack.c.bf16 %v52, %v52
    %v65 = vpack.c.bf16 %v53, %v53
    %v66 = vpack.c.bf16 %v54, %v54
    %v67 = vpack.c.bf16 %v55, %v55
    %v68 = vpack.c.bf16 %v56, %v56
    %v69 = vpack.c.bf16 %v57, %v57
    %v70 = vpack.c.bf16 %v58, %v58
    %v71 = vpack.c.bf16 %v59, %v59
    %v72 = vpack.c.bf16 %v60, %v60
    %v73 = vpack.c.bf16 %v61, %v61
    %v74 = vpack.c.bf16 %v62, %v62
    %v75 = vpack.c.bf16 %v63, %v63
    %v76 = vld [vmem:[%s1] sm:$0xf]
    %v77 = vld [vmem:[%s1 + $0x4] sm:$0xf]
    %v90 = vunpack.c.l.b16 %v64
    %v91 = vunpack.c.l.b16 %v65
    %v92 = vunpack.c.l.b16 %v66
    %v93 = vunpack.c.l.b16 %v67
    %v94 = vunpack.c.l.b16 %v68
    %v95 = vunpack.c.l.b16 %v69
    %v96 = vunpack.c.l.b16 %v70
    %v97 = vunpack.c.l.b16 %v71
    %v98 = vunpack.c.l.b16 %v72
    %v99 = vunpack.c.l.b16 %v73
    %v100 = vunpack.c.l.b16 %v74
    %v101 = vunpack.c.l.b16 %v75
    %v102 = vpack.c.b16 %v91, %v90
    %v103 = vpack.c.b16 %v93, %v92
    %v104 = vpack.c.b16 %v95, %v94
    %v105 = vpack.c.b16 %v97, %v96
    %v106 = vpack.c.b16 %v99, %v98
    %v107 = vpack.c.b16 %v101, %v100
    %v110 = vunpack.c.l.b16 %v76
    %v111 = vunpack.c.l.b16 %v77
    %v112 = vpack.c.b16 %v111, %v110
    %vm114 = vcmask 130048
    %v116 = vsel %vm114, %v102, 0
    %v119 = vsel %vm114, %v103, 0
    %v122 = vsel %vm114, %v104, 0
    %v125 = vsel %vm114, %v105, 0
    %v128 = vsel %vm114, %v106, 0
    %v131 = vsel %vm114, %v107, 0
    %133 = vmatpush.bf16.msra.mxu0 0
    %134 = vmatpush.bf16.msra.mxu0 0
    %135 = vmatpush.bf16.msra.mxu0 0
    %136 = vmatpush.bf16.msra.mxu0 0
    %137 = vmatpush.bf16.msra.mxu0 0
    %138 = vmatpush.bf16.msra.mxu0 0
    %139 = vmatpush.bf16.msra.mxu0 0
    %140 = vmatpush.bf16.msra.mxu0 %v112
    %141 = vmatmul.bf16.gmra.mxu0 %v116
    %v142 = vpop.f32.mrf.mxu0
    %v143 = vadd.f32 0.0, %v142
    %v144 = vpop.f32.mrf.mxu0
    %v145 = vadd.f32 0.0, %v144
    %146 = vmatmul.bf16.gmra.mxu0 %v119
    %v147 = vpop.f32.mrf.mxu0
    %v148 = vadd.f32 0.0, %v147
    %v149 = vpop.f32.mrf.mxu0
    %v150 = vadd.f32 0.0, %v149
    %151 = vmatmul.bf16.gmra.mxu0 %v122
    %v152 = vpop.f32.mrf.mxu0
    %v153 = vadd.f32 0.0, %v152
    %v154 = vpop.f32.mrf.mxu0
    %v155 = vadd.f32 0.0, %v154
    %156 = vmatmul.bf16.gmra.mxu0 %v125
    %v157 = vpop.f32.mrf.mxu0
    %v158 = vadd.f32 0.0, %v157
    %v159 = vpop.f32.mrf.mxu0
    %v160 = vadd.f32 0.0, %v159
    %161 = vmatmul.bf16.gmra.mxu0 %v128
    %v162 = vpop.f32.mrf.mxu0
    %v163 = vadd.f32 0.0, %v162
    %v164 = vpop.f32.mrf.mxu0
    %v165 = vadd.f32 0.0, %v164
    %166 = vmatmul.bf16.gmra.mxu0 %v131
    %v167 = vpop.f32.mrf.mxu0
    %v168 = vadd.f32 0.0, %v167
    %v169 = vpop.f32.mrf.mxu0
    %v170 = vadd.f32 0.0, %v169
    %171 = vdwg.mxu0
    %v172 = vpack.c.bf16 %v143, %v143
    %v173 = vpack.c.bf16 %v145, %v145
    %v174 = vpack.c.bf16 %v148, %v148
    %v175 = vpack.c.bf16 %v150, %v150
    %v176 = vpack.c.bf16 %v153, %v153
    %v177 = vpack.c.bf16 %v155, %v155
    %v178 = vpack.c.bf16 %v158, %v158
    %v179 = vpack.c.bf16 %v160, %v160
    %v180 = vpack.c.bf16 %v163, %v163
    %v181 = vpack.c.bf16 %v165, %v165
    %v182 = vpack.c.bf16 %v168, %v168
    %v183 = vpack.c.bf16 %v170, %v170
    %v184 = vld [vmem:[%s2] sm:$0xf]
    %v187 = vunpack.c.l.b16 %v172
    %v188 = vunpack.c.l.b16 %v173
    %v189 = vpack.c.b16 %v188, %v187
    %v192 = vsel %vm114, %v184, 0
    %194 = vmatpush.bf16.msra.mxu0 0
    %195 = vmatpush.bf16.msra.mxu0 0
    %196 = vmatpush.bf16.msra.mxu0 0
    %197 = vmatpush.bf16.msra.mxu0 0
    %198 = vmatpush.bf16.msra.mxu0 0
    %199 = vmatpush.bf16.msra.mxu0 0
    %200 = vmatpush.bf16.msra.mxu0 0
    %201 = vmatpush.bf16.msra.mxu0 %v189
    %202 = vmatmul.bf16.gmra.mxu0 %v192
    %v203 = vpop.f32.mrf.mxu0
    %v204 = vadd.f32 -2.117904, %v203
    %v205 = vpop.f32.mrf.mxu0
    %206 = vdwg.mxu0
    %207 = vst [vmem:[#allocation2] sm:$0xff] %v204
    %s208 = scalar_lea.vmem %s2, 4
    %v209 = vld [vmem:[%s208] sm:$0xf]
    %v212 = vunpack.c.l.b16 %v174
    %v213 = vunpack.c.l.b16 %v175
    %v214 = vpack.c.b16 %v213, %v212
    %v217 = vsel %vm114, %v209, 0
    %219 = vmatpush.bf16.msra.mxu0 0
    %220 = vmatpush.bf16.msra.mxu0 0
    %221 = vmatpush.bf16.msra.mxu0 0
    %222 = vmatpush.bf16.msra.mxu0 0
    %223 = vmatpush.bf16.msra.mxu0 0
    %224 = vmatpush.bf16.msra.mxu0 0
    %225 = vmatpush.bf16.msra.mxu0 0
    %226 = vmatpush.bf16.msra.mxu0 %v214
    %227 = vmatmul.bf16.gmra.mxu0 %v217
    %v228 = vpop.f32.mrf.mxu0
    %v229 = vadd.f32 -2.0357144, %v228
    %v230 = vpop.f32.mrf.mxu0
    %231 = vdwg.mxu0
    %s232 = scalar_lea.vmem [#allocation2], 8
    %233 = vst [vmem:[%s232] sm:$0xff] %v229
    %s234 = scalar_lea.vmem %s2, 8
    %v235 = vld [vmem:[%s234] sm:$0xf]
    %v238 = vunpack.c.l.b16 %v176
    %v239 = vunpack.c.l.b16 %v177
    %v240 = vpack.c.b16 %v239, %v238
    %v243 = vsel %vm114, %v235, 0
    %245 = vmatpush.bf16.msra.mxu0 0
    %246 = vmatpush.bf16.msra.mxu0 0
    %247 = vmatpush.bf16.msra.mxu0 0
    %248 = vmatpush.bf16.msra.mxu0 0
    %249 = vmatpush.bf16.msra.mxu0 0
    %250 = vmatpush.bf16.msra.mxu0 0
    %251 = vmatpush.bf16.msra.mxu0 0
    %252 = vmatpush.bf16.msra.mxu0 %v240
    %253 = vmatmul.bf16.gmra.mxu0 %v243
    %v254 = vpop.f32.mrf.mxu0
    %v255 = vadd.f32 -1.8044444, %v254
    %v256 = vpop.f32.mrf.mxu0
    %257 = vdwg.mxu0
    %s258 = scalar_lea.vmem [#allocation2], 16
    %259 = vst [vmem:[%s258] sm:$0xff] %v255
    %v260 = vld [vmem:[%s2] sm:$0xf]
    %v263 = vunpack.c.l.b16 %v178
    %v264 = vunpack.c.l.b16 %v179
    %v265 = vpack.c.b16 %v264, %v263
    %v268 = vsel %vm114, %v260, 0
    %270 = vmatpush.bf16.msra.mxu0 0
    %271 = vmatpush.bf16.msra.mxu0 0
    %272 = vmatpush.bf16.msra.mxu0 0
    %273 = vmatpush.bf16.msra.mxu0 0
    %274 = vmatpush.bf16.msra.mxu0 0
    %275 = vmatpush.bf16.msra.mxu0 0
    %276 = vmatpush.bf16.msra.mxu0 0
    %277 = vmatpush.bf16.msra.mxu0 %v265
    %278 = vmatmul.bf16.gmra.mxu0 %v268
    %v279 = vpop.f32.mrf.mxu0
    %v280 = vadd.f32 -2.117904, %v279
    %v281 = vpop.f32.mrf.mxu0
    %282 = vdwg.mxu0
    %s283 = scalar_lea.vmem [#allocation2], 24
    %284 = vst [vmem:[%s283] sm:$0xff] %v280
    %v285 = vld [vmem:[%s208] sm:$0xf]
    %v288 = vunpack.c.l.b16 %v180
    %v289 = vunpack.c.l.b16 %v181
    %v290 = vpack.c.b16 %v289, %v288
    %v293 = vsel %vm114, %v285, 0
    %295 = vmatpush.bf16.msra.mxu0 0
    %296 = vmatpush.bf16.msra.mxu0 0
    %297 = vmatpush.bf16.msra.mxu0 0
    %298 = vmatpush.bf16.msra.mxu0 0
    %299 = vmatpush.bf16.msra.mxu0 0
    %300 = vmatpush.bf16.msra.mxu0 0
    %301 = vmatpush.bf16.msra.mxu0 0
    %302 = vmatpush.bf16.msra.mxu0 %v290
    %303 = vmatmul.bf16.gmra.mxu0 %v293
    %v304 = vpop.f32.mrf.mxu0
    %v305 = vadd.f32 -2.0357144, %v304
    %v306 = vpop.f32.mrf.mxu0
    %307 = vdwg.mxu0
    %s308 = scalar_lea.vmem [#allocation2], 32
    %309 = vst [vmem:[%s308] sm:$0xff] %v305
    %v310 = vld [vmem:[%s234] sm:$0xf]
    %v313 = vunpack.c.l.b16 %v182
    %v314 = vunpack.c.l.b16 %v183
    %v315 = vpack.c.b16 %v314, %v313
    %v318 = vsel %vm114, %v310, 0
    %320 = vmatpush.bf16.msra.mxu0 0
    %321 = vmatpush.bf16.msra.mxu0 0
    %322 = vmatpush.bf16.msra.mxu0 0
    %323 = vmatpush.bf16.msra.mxu0 0
    %324 = vmatpush.bf16.msra.mxu0 0
    %325 = vmatpush.bf16.msra.mxu0 0
    %326 = vmatpush.bf16.msra.mxu0 0
    %327 = vmatpush.bf16.msra.mxu0 %v315
    %328 = vmatmul.bf16.gmra.mxu0 %v318
    %v329 = vpop.f32.mrf.mxu0
    %v330 = vadd.f32 -1.8044444, %v329
    %v331 = vpop.f32.mrf.mxu0
    %332 = vdwg.mxu0
    %s333 = scalar_lea.vmem [#allocation2], 40
    %334 = vst [vmem:[%s333] sm:$0xff] %v330
    // Predicated region
    $region14: #{tpu_custom_call.1} parent=1 // pred_check
      _
    $region15: #{tpu_custom_call.1} parent=1 // pred_check_branch
      %336 = sbr.rel (0) target = $region17
    $region16: #{tpu_custom_call.1} parent=1 // pred_region
      %338 = vsyncadd [#allocation3], 0
      %s339 = sshll.u32 [#allocation2], 4
      %s340 = int_to_ptr.vmem [resolvable:$true] %s339
      %s341 = sshll.u32 %s3, 4
      %s342 = int_to_ptr.hbm [resolvable:$true] %s341
      %347 = dma.vmem_to_hbm [thread:$0]  %s340, 768, %s342, [#allocation3], 128, 128, 8
    $region17: #{tpu_custom_call.1} parent=1 // pred_fallthru
      _
    // Predicated region
    $region18: #{tpu_custom_call.1} parent=1 // pred_check
      _
    $region19: #{tpu_custom_call.1} parent=1 // pred_check_branch
      %349 = sbr.rel (0) target = $region21
    $region20: #{tpu_custom_call.1} parent=1 // pred_region
      %351 = dma.done [#allocation3], 768
    $region21: #{tpu_custom_call.1} parent=1 // pred_fallthru
      _
    %352 = vsyncpa [#allocation3], 1

</llo_original>
